<compile_context>
chip_gen: v7x
topology: tpu7x:2x2x1
jax: 0.10.0
libtpu: 0.0.40
codegen_flags: <defaults>
</compile_context>

<pallas_src>
import functools

import jax
import jax.numpy as jnp
from jax.experimental import pallas as pl
from jax.experimental.pallas import tpu as pltpu


# ----------------------------------------------------------------------------
# Generation-aware VMEM budgeting
# ----------------------------------------------------------------------------
@functools.lru_cache(maxsize=1)
def _vmem_capacity_bytes() -> int:
    """Physical VMEM per TensorCore; conservative (v7x, 64 MiB) fallback."""
    try:
        cap = int(pltpu.get_tpu_info().vmem_capacity_bytes)
        if cap > 0:
            return cap
    except Exception:
        pass
    return 64 * 1024 * 1024


@functools.lru_cache(maxsize=1)
def _vmem_limit_bytes() -> int:
    """~3/4 of physical VMEM: ~48 MiB on v7x, ~96 MiB on v5e/v6e."""
    return min((_vmem_capacity_bytes() * 3) // 4, 96 * 1024 * 1024)


# ----------------------------------------------------------------------------
# Layout / tiling helpers
# ----------------------------------------------------------------------------
def _prod(shape):
    p = 1
    for d in shape:
        p *= int(d)
    return p


def _sublane_unit(dtype) -> int:
    """Sublane packing unit: 8 (32-bit), 16 (bf16/fp16), 32 (int8/fp8)."""
    return 8 * max(1, 4 // jnp.dtype(dtype).itemsize)


def _lane_dense_2d(param_shape, dtype):
    """Padded (rows, lanes) working shape: lanes % 128 == 0, rows % sublane == 0."""
    p = _prod(param_shape)
    sub = _sublane_unit(dtype)
    if p % 128 == 0:
        lanes = 128
        k = 2
        while 128 * k <= min(p, 1024):
            if p % (128 * k) == 0:
                lanes = 128 * k
            k += 1
    else:
        lanes = 128                       # pad the tail; never a (1, p) layout
    rows = pl.cdiv(p, lanes)
    rows = pl.cdiv(rows, sub) * sub       # dtype-aware sublane alignment
    return rows, lanes


def _pick_block(dim, unit, target):
    """Largest multiple of `unit` dividing `dim` that is <= target.
    `dim` is always a multiple of `unit` by bank construction, so `unit` is a
    valid (bounded) fallback — no oversized full-dim tiles."""
    if dim <= target:
        return dim
    t = (min(target, dim) // unit) * unit
    while t > unit:
        if dim % t == 0:
            return t
        t -= unit
    return unit


def _pick_task_block(n_tasks, tile_bytes, budget_bytes):
    """Tasks reduced per grid step, bounded by a double-buffered VMEM budget."""
    best = 1
    for t in range(1, n_tasks + 1):
        if n_tasks % t == 0 and 2 * t * tile_bytes <= budget_bytes:
            best = t
    return best


# ----------------------------------------------------------------------------
# Kernel 1: forward() — select the current task's parameter slab
# ----------------------------------------------------------------------------
_FORWARD_PALLAS_MIN_BYTES = 1 << 20   # below this, XLA dynamic-slice is cheaper


def _select_kernel(idx_ref, bank_ref, out_ref):
    # The slot selection already happened in the index_map via the
    # scalar-prefetched index; the kernel body is a straight tile copy.
    del idx_ref
    out_ref[...] = bank_ref[0]


def _forward_select_pallas(bank: jax.Array, idx: jax.Array) -> jax.Array:
    num_slots, rows, lanes = bank.shape
    itemsize = bank.dtype.itemsize
    sub = _sublane_unit(bank.dtype)
    limit = _vmem_limit_bytes()
    # in + out tiles, double-buffered -> keep one tile at <= limit/8.
    max_rows = max(sub, (limit // 8) // max(1, lanes * itemsize))
    tr = _pick_block(rows, sub, max_rows)
    return pl.pallas_call(
        _select_kernel,
        out_shape=jax.ShapeDtypeStruct((rows, lanes), bank.dtype),
        grid_spec=pltpu.PrefetchScalarGridSpec(
            num_scalar_prefetch=1,
            grid=(rows // tr,),
            in_specs=[pl.BlockSpec((1, tr, lanes),
                                   lambda i, idx_ref: (idx_ref[0], i, 0))],
            out_specs=pl.BlockSpec((tr, lanes), lambda i, idx_ref: (i, 0)),
        ),
        compiler_params=pltpu.CompilerParams(
            dimension_semantics=("parallel",),
            vmem_limit_bytes=limit,
        ),
        cost_estimate=pl.CostEstimate(
            flops=0, transcendentals=0,
            bytes_accessed=2 * rows * lanes * itemsize),
    )(idx, bank)


def cl_parameter_forward(bank: jax.Array, task_idx, *,
                         force_pallas: bool = False) -> jax.Array:
    """Returns bank[task_idx] as a (rows, lanes) slab."""
    num_slots, rows, lanes = bank.shape
    idx = jnp.clip(jnp.asarray(task_idx, jnp.int32).reshape(()), 0, num_slots - 1)
    # TODO(synk): an out-of-range index is clamped silently here; host-side
    # validation happens in CLParameterPallas via the slot-dict lookup.
    slot_bytes = rows * lanes * bank.dtype.itemsize
    if not force_pallas and slot_bytes < _FORWARD_PALLAS_MIN_BYTES:
        # Small adapter-sized params: fixed pallas_call/DMA overhead dominates.
        return jax.lax.dynamic_index_in_dim(bank, idx, axis=0, keepdims=False)
    return _forward_select_pallas(bank, idx.reshape((1,)))


# ----------------------------------------------------------------------------
# Kernel 2: average_adapter() — mean over the first n_regular slots, written
#           in place into the '_average_' slot of the (donated) bank.
# ----------------------------------------------------------------------------
def _avg_kernel_inplace_f32(bank_ref, out_ref, *, inv_n):
    # f32 bank: the resident output block IS the accumulator (no scratch).
    t = pl.program_id(2)

    @pl.when(t == 0)
    def _():
        out_ref[...] = jnp.zeros_like(out_ref)

    out_ref[...] += jnp.sum(bank_ref[...], axis=0, keepdims=True)

    @pl.when(t == pl.num_programs(2) - 1)
    def _():
        out_ref[...] *= inv_n


def _avg_kernel_inplace_acc(bank_ref, out_ref, acc_ref, *, inv_n):
    # non-f32 banks: accumulate in a small f32 VMEM scratch, cast once at end.
    t = pl.program_id(2)

    @pl.when(t == 0)
    def _():
        acc_ref[...] = jnp.zeros_like(acc_ref)

    acc_ref[...] += jnp.sum(bank_ref[...].astype(jnp.float32), axis=0,
                            keepdims=True)

    @pl.when(t == pl.num_programs(2) - 1)
    def _():
        out_ref[...] = (acc_ref[...] * inv_n).astype(out_ref.dtype)


@functools.partial(jax.jit, static_argnums=(1, 2), donate_argnums=(0,))
def cl_parameter_average_inplace(bank, n_regular, avg_slot):
    """mean(bank[:n_regular], axis=0) written into bank[avg_slot] in place.

    The bank buffer is donated and aliased to the output, so the untouched
    slots are preserved without any full-bank copy.  Returns the updated bank.
    """
    num_slots, rows, lanes = bank.shape
    assert 0 < n_regular <= num_slots
    assert n_regular <= avg_slot < num_slots, (
        "average slot must not overlap the slots being reduced")

    itemsize = bank.dtype.itemsize
    sub = _sublane_unit(bank.dtype)
    limit = _vmem_limit_bytes()

    tc = lanes                                   # lane-dense by construction
    # Cap one (tr, tc) tile at ~1/8 of the VMEM limit so even tt=1 fits.
    max_tile_bytes = limit // 8
    tr = _pick_block(rows, sub, max(sub, max_tile_bytes // (tc * itemsize)))

    # v7x has 2 TensorCores; ensure the "parallel" spatial grid has >= 2 blocks
    # when the tile is big enough for the split to pay off.
    if (rows // tr) * (lanes // tc) < 2 and tr * tc * itemsize >= 64 * 1024:
        if rows // sub >= 2:
            tr = _pick_block(rows, sub, rows // 2)
        elif lanes // 128 >= 2:
            tc = _pick_block(lanes, 128, lanes // 2)

    tile_bytes = tr * tc * itemsize
    is_f32 = bank.dtype == jnp.float32
    out_bytes = 2 * tile_bytes                   # output block (buffered)
    scratch_bytes = 0 if is_f32 else tr * tc * 4
    input_budget = max(2 * tile_bytes,
                       limit - out_bytes - scratch_bytes - (2 << 20))
    tt = _pick_task_block(n_regular, tile_bytes, input_budget)

    grid = (rows // tr, lanes // tc, n_regular // tt)   # reduction axis last
    inv_n = 1.0 / n_regular

    if is_f32:
        kernel = functools.partial(_avg_kernel_inplace_f32, inv_n=inv_n)
        scratch = []
    else:
        kernel = functools.partial(_avg_kernel_inplace_acc, inv_n=inv_n)
        scratch = [pltpu.VMEM((1, tr, tc), jnp.float32)]

    return pl.pallas_call(
        kernel,
        out_shape=jax.ShapeDtypeStruct(bank.shape, bank.dtype),
        grid_spec=pltpu.PrefetchScalarGridSpec(
            num_scalar_prefetch=0,
            grid=grid,
            in_specs=[pl.BlockSpec((tt, tr, tc), lambda i, j, t: (t, i, j))],
            out_specs=pl.BlockSpec((1, tr, tc),
                                   lambda i, j, t: (avg_slot, i, j)),
            scratch_shapes=scratch,
        ),
        # Averaged tiles go straight back into the bank's avg slot; all other
        # slots are preserved because the (donated) buffer is aliased.
        input_output_aliases={0: 0},
        compiler_params=pltpu.CompilerParams(
            dimension_semantics=("parallel", "parallel", "arbitrary"),
            vmem_limit_bytes=limit,
        ),
        cost_estimate=pl.CostEstimate(
            flops=n_regular * rows * lanes,
            transcendentals=0,
            bytes_accessed=(n_regular + 1) * rows * lanes * itemsize),
    )(bank)


# ----------------------------------------------------------------------------
# Thin Python port of CLParameter's continual-learning bookkeeping.
# (state machine / dict plumbing stays in Python; tensor ops are Pallas/XLA)
# ----------------------------------------------------------------------------
def not_special_task(task_name: str) -> bool:
    return not task_name.startswith("_")


class CLParameterPallas:
    """JAX/Pallas analogue of clacl.model.cl.CLParameter (state='cl')."""

    def __init__(self, param_shape, dtype=jnp.float32):
        self.param_shape = tuple(int(d) for d in param_shape)
        self.dtype = jnp.dtype(dtype)
        self._numel = _prod(self.param_shape)
        self._norm_shape = _lane_dense_2d(self.param_shape, self.dtype)
        self._params: dict[str, jax.Array] = {}
        self.current_task: str | None = None
        self._previous_task: str | None = None
        self._bank: jax.Array | None = None
        self._slot: dict[str, int] = {}
        self._n_regular: int = 0

    # --- cached bank (built once per task-set change, never per forward) ---
    def _invalidate(self):
        self._bank = None

    def _ensure_bank(self) -> jax.Array:
        if self._bank is None:
            # regular tasks occupy contiguous leading slots, specials after
            names = [n for n in self._params if not_special_task(n)]
            names += [n for n in self._params if not not_special_task(n)]
            self._slot = {n: i for i, n in enumerate(names)}
            self._n_regular = sum(1 for n in names if not_special_task(n))
            rows, lanes = self._norm_shape
            pad = rows * lanes - self._numel

            def to_slot(x):
                flat = x.reshape(-1)
                if pad:
                    flat = jnp.pad(flat, (0, pad))
                return flat.reshape(rows, lanes)

            self._bank = jnp.stack([to_slot(self._params[n]) for n in names],
                                   axis=0)
        return self._bank

    def bank_and_index(self):
        """(bank, idx) for fusing the task selection directly into a consumer
        kernel's index_map (num_scalar_prefetch=1,
        lambda i, j, idx: (idx[0], i, j)) — avoids materializing forward()."""
        bank = self._ensure_bank()
        return bank, jnp.array([self._slot[self.current_task]], jnp.int32)

    # --- CLParameter API ----------------------------------------------------
    def add_adapter(self, task_name: str, key: jax.Array):
        param = jax.random.normal(key, self.param_shape, dtype=self.dtype)
        self._params[task_name] = param
        self._invalidate()
        self._previous_task = self.current_task
        self.current_task = task_name
        # TODO(synk): requires_grad / set_grad freezing has no JAX array-level
        # equivalent; parameter freezing is the training loop's responsibility.

    def set_task(self, task_name: str):
        self._previous_task = self.current_task
        self.current_task = task_name

    def forward(self, *, force_pallas: bool = False) -> jax.Array:
        assert self.current_task, f"no current_task set in {self!r}"
        bank = self._ensure_bank()
        idx = jnp.array(self._slot[self.current_task], dtype=jnp.int32)
        slab = cl_parameter_forward(bank, idx, force_pallas=force_pallas)
        return slab.reshape(-1)[: self._numel].reshape(self.param_shape)

    def average_adapter(self):
        task_name = "_average_"
        if self.current_task == task_name:
            return
        if task_name not in self._params:
            self._params[task_name] = jnp.zeros(self.param_shape, self.dtype)
            self._invalidate()
        bank = self._ensure_bank()
        assert self._n_regular > 0, "no regular task parameters to average"
        avg_slot = self._slot[task_name]
        n_regular = self._n_regular
        # Drop our reference first so jit donation (donate_argnums=0) makes the
        # aliased update truly in place (no defensive full-bank copy).
        self._bank = None
        new_bank = cl_parameter_average_inplace(bank, n_regular, avg_slot)
        del bank
        self._bank = new_bank
        # keep the per-task dict in sync for any future bank rebuild
        self._params[task_name] = (
            new_bank[avg_slot].reshape(-1)[: self._numel]
            .reshape(self.param_shape))
        self._previous_task = self.current_task
        self.current_task = task_name


# ----------------------------------------------------------------------------
if __name__ == "__main__":
    R, C = 8, 32                       # small per-task parameter (seq, hidden)
    key = jax.random.PRNGKey(0)
    keys = jax.random.split(key, 3)

    module = CLParameterPallas((R, C), dtype=jnp.float32)
    for i, name in enumerate(["task_a", "task_b", "task_c"]):
        module.add_adapter(name, keys[i])

    # --- forward(): small-slot fast path (lax.dynamic_index_in_dim) ---
    module.set_task("task_b")
    out = jax.block_until_ready(module.forward())
    ref = module._params["task_b"]
    assert out.shape == (R, C) and out.dtype == ref.dtype
    assert jnp.allclose(out, ref), "forward() selection mismatch (fast path)"

    # --- forward(): Pallas scalar-prefetch select kernel (forced) ---
    out_pl = jax.block_until_ready(module.forward(force_pallas=True))
    assert jnp.allclose(out_pl, ref), "forward() selection mismatch (pallas)"

    # --- average_adapter(): '_average_' = mean over task params, in place ---
    module.average_adapter()
    avg_out = jax.block_until_ready(module.forward())   # current = '_average_'
    avg_ref = jnp.mean(jnp.stack(
        [module._params[n] for n in ("task_a", "task_b", "task_c")], axis=0),
        axis=0)
    assert jnp.allclose(avg_out, avg_ref, atol=1e-6), "average_adapter() mismatch"

    # other tasks still retrievable from the in-place-updated (donated) bank
    module.set_task("task_a")
    a_out = jax.block_until_ready(module.forward())
    assert jnp.allclose(a_out, module._params["task_a"]), "bank slot clobbered"

    # --- bf16 bank: exercises the f32-scratch accumulation path and the
    #     dtype-aware 16-sublane layout ---
    mod16 = CLParameterPallas((R, C), dtype=jnp.bfloat16)
    k16 = jax.random.split(jax.random.PRNGKey(1), 4)
    for i, name in enumerate(["t0", "t1", "t2", "t3"]):
        mod16.add_adapter(name, k16[i])
    mod16.set_task("t2")
    t2_pl = jax.block_until_ready(mod16.forward(force_pallas=True))
    assert jnp.allclose(t2_pl.astype(jnp.float32),
                        mod16._params["t2"].astype(jnp.float32)), \
        "bf16 forward() selection mismatch"
    mod16.average_adapter()
    avg16 = jax.block_until_ready(mod16.forward())
    ref16 = jnp.mean(jnp.stack(
        [mod16._params[n].astype(jnp.float32) for n in ("t0", "t1", "t2", "t3")],
        axis=0), axis=0)
    assert avg16.dtype == jnp.bfloat16
    assert jnp.allclose(avg16.astype(jnp.float32), ref16, atol=2e-2, rtol=2e-2), \
        "bf16 average_adapter() mismatch"

    print("KERNEL_OK")
</pallas_src>

<mosaic_0001>
module attributes {stable_mosaic.version = 11 : i64} {
  func.func @_select_kernel(%arg0: i32, %arg1: memref<1xi32, #tpu.memory_space<smem>>, %arg2: memref<1x8x256xf32, #tpu.memory_space<vmem>>, %arg3: memref<8x256xf32, #tpu.memory_space<vmem>>) attributes {dimension_semantics = [#tpu.dimension_semantics<parallel>], iteration_bounds = array<i64: 1>, scalar_prefetch = 1 : i64, scratch_operands = 0 : i64, tpu.core_type = #tpu.core_type<tc>, window_params = [{transform_indices = @transform_0, window_bounds = array<i64: 1, 8, 256>}, {transform_indices = @transform_1, window_bounds = array<i64: 8, 256>}]} {
    %c0 = arith.constant 0 : index
    %c0_0 = arith.constant 0 : index
    %c0_1 = arith.constant 0 : index
    %0 = vector.load %arg2[%c0, %c0_0, %c0_1] : memref<1x8x256xf32, #tpu.memory_space<vmem>>, vector<1x8x256xf32>
    %1 = vector.shape_cast %0 : vector<1x8x256xf32> to vector<8x256xf32>
    %c0_2 = arith.constant 0 : index
    %c0_3 = arith.constant 0 : index
    %2 = vector.load %arg3[%c0_2, %c0_3] : memref<8x256xf32, #tpu.memory_space<vmem>>, vector<8x256xf32>
    tpu.vector_store %arg3[%c0_2, %c0_3], %1 {strides = array<i32>} : memref<8x256xf32, #tpu.memory_space<vmem>>, vector<8x256xf32>,
    return
  }
  func.func @transform_0(%arg0: i32, %arg1: memref<1xi32, #tpu.memory_space<smem>>) -> (i32, i32, i32) {
    %c0 = arith.constant 0 : index
    %0 = memref.load %arg1[%c0] : memref<1xi32, #tpu.memory_space<smem>>
    %c0_i32 = arith.constant 0 : i32
    %c0_i32_0 = arith.constant 0 : i32
    return %0, %arg0, %c0_i32 : i32, i32, i32
  }
  func.func @transform_1(%arg0: i32, %arg1: memref<1xi32, #tpu.memory_space<smem>>) -> (i32, i32) {
    %c0_i32 = arith.constant 0 : i32
    %c0_i32_0 = arith.constant 0 : i32
    return %arg0, %c0_i32 : i32, i32
  }
}

</mosaic_0001>

<llo_original>
// kernel: tpu_custom_call.1
$region0: #{tpu_custom_call.1}
  #allocation0 [shape = 'u32[]', space=smem, size = 0x4, offset = 0x4, fixed_abs, tag = 'smem constant byte address 0x4 - core index']
  #allocation1 [shape = 'u32[144,128]{1,0:T(1,128)}', space=vmem, size = 0x12000, scoped, tag = 'internal scratch']
  #allocation2 [shape = 's32[1]{0}', space=sflag, size = 0x4, scoped, tag = 'scoped memory for tpu_custom_call.1']
  #allocation3 [shape = 's32[1]{0:T(128)S(6)}', space=smem, size = 0x200, scoped, tag = 'prefetched SMEM operand 0']
  %s0 = inlined_call_operand.<no memory space> [shape: s32[1], index: 0, kind: input, shape index: {}]
  %s1 = inlined_call_operand.hbm [shape: f32[3,8,256], index: 1, kind: input, shape index: {}]
  %s2 = inlined_call_operand.hbm [shape: f32[8,256], index: 2, kind: output, shape index: {}]
  %s3 = sld [smem:[#allocation0]]
  $region18: #{tpu_custom_call.1} parent=0
    _
  %s5 = ssub.s32 1, %s3
  %s6 = scalar_select 0, %s5, %s3
  %7 = sst [smem:[#allocation3]] %s0
  $region1: #{tpu_custom_call.1} parent=0
    #allocation4 [shape = 'u8[8192]{0}', space=vmem, size = 0x2000, scoped, tag = 'input window, operand 1, single buffered']
    #allocation5 [shape = 's32[1]{0}', space=sflag, size = 0x4, scoped, tag = 'scoped memory for tpu_custom_call.1']
    #allocation6 [shape = 's32[1]{0}', space=sflag, size = 0x4, scoped, tag = 'scoped memory for tpu_custom_call.1']
    #allocation7 [shape = 'u8[8192]{0}', space=vmem, size = 0x2000, scoped, tag = 'output window, operand 0, single buffered']
    %8 = vsyncpa [#allocation5], 0
    %9 = vsyncpa [#allocation6], 0
    // Predicated region
    $region2: #{tpu_custom_call.1} parent=1 // pred_check
      _
    $region3: #{tpu_custom_call.1} parent=1 // pred_check_branch
      %11 = sbr.rel (0) target = $region5
    $region4: #{tpu_custom_call.1} parent=1 // pred_region
      %s12 = sld [smem:[#allocation3]]
      %s14 = ssub.s32 256, 256
      %15 = vsyncadd [#allocation5], %s14
      %s16 = smul.addr %s12, 2
      %s17 = smul.addr %s16, 128
      %s18 = scalar_lea.hbm %s1, %s17
      %s20 = sshll.u32 [#allocation4], 4
      %s21 = int_to_ptr.vmem [resolvable:$true] %s20
      %23 = dma.hbm_to_vmem [thread:$0]  %s18, 256, %s21, [#allocation5]
    $region5: #{tpu_custom_call.1} parent=1 // pred_fallthru
      _
    // Predicated region
    $region6: #{tpu_custom_call.1} parent=1 // pred_check
      _
    $region7: #{tpu_custom_call.1} parent=1 // pred_check_branch
      %25 = sbr.rel (0) target = $region9
    $region8: #{tpu_custom_call.1} parent=1 // pred_region
      %26 = dma.done [#allocation5], 256
    $region9: #{tpu_custom_call.1} parent=1 // pred_fallthru
      _
    %s27 = sld [smem:[#allocation3]]
    %v28 = vld [vmem:[#allocation4] sm:$0xff]
    %v29 = vld [vmem:[#allocation4 + $0x8] sm:$0xff]
    %30 = vst [vmem:[#allocation7] sm:$0xff] %v28
    %31 = vst [vmem:[#allocation7 + $0x8] sm:$0xff] %v29
    // Predicated region
    $region10: #{tpu_custom_call.1} parent=1 // pred_check
      _
    $region11: #{tpu_custom_call.1} parent=1 // pred_check_branch
      %33 = sbr.rel (0) target = $region13
    $region12: #{tpu_custom_call.1} parent=1 // pred_region
      %s35 = ssub.s32 256, 256
      %36 = vsyncadd [#allocation6], %s35
      %s38 = sshll.u32 [#allocation7], 4
      %s39 = int_to_ptr.vmem [resolvable:$true] %s38
      %41 = dma.vmem_to_hbm [thread:$0]  %s39, 256, %s2, [#allocation6]
    $region13: #{tpu_custom_call.1} parent=1 // pred_fallthru
      _
    // Predicated region
    $region14: #{tpu_custom_call.1} parent=1 // pred_check
      _
    $region15: #{tpu_custom_call.1} parent=1 // pred_check_branch
      %43 = sbr.rel (0) target = $region17
    $region16: #{tpu_custom_call.1} parent=1 // pred_region
      %44 = dma.done [#allocation6], 256
    $region17: #{tpu_custom_call.1} parent=1 // pred_fallthru
      _
    %45 = vsyncpa [#allocation5], 1
    %46 = vsyncpa [#allocation6], 1

</llo_original>
